<compile_context>
chip_gen: v6e
topology: v6e:2x2x1
jax: 0.10.0
libtpu: 0.0.40
codegen_flags: <defaults>
</compile_context>

<pallas_src>
import functools
import math

import jax
import jax.numpy as jnp
from jax import lax
from jax.experimental import pallas as pl
from jax.experimental.pallas import tpu as pltpu


def _round_up(x, m):
    return (x + m - 1) // m * m


# ---------------------------------------------------------------------------
# Stage 1: streamed spatial-sum reduction (the HBM-bound part).
# ---------------------------------------------------------------------------
def _pool_partial_kernel(x_ref, psum_ref):
    # x_ref:    (B, C, HW_BLK)  -- one spatial chunk, HW on the lane axis
    # psum_ref: (1, B, C) f32   -- per-core partial sum, resident across k
    k = pl.program_id(1)

    @pl.when(k == 0)
    def _():
        psum_ref[...] = jnp.zeros_like(psum_ref)

    # Upcast per chunk (supports bf16 streaming; must happen BEFORE the sum so
    # accumulation is f32), then collapse the lane axis.  Zero-padded spatial
    # columns contribute nothing to the sum.
    chunk = x_ref[...].astype(jnp.float32)
    psum_ref[...] += jnp.sum(chunk, axis=-1)[None, :, :]


# ---------------------------------------------------------------------------
# Stage 2: tiny epilogue -- combine partials, Linear, BatchNorm1d, L2 norm.
# ---------------------------------------------------------------------------
def _finalize_kernel(psum_ref, w_ref, gamma_ref, beta_ref, o_ref, *, inv_hw):
    # psum_ref:  (P, B, C) f32
    # w_ref:     (C, E)    f32   -- nn.Linear weight, pre-transposed
    # gamma_ref: (1, E)    f32
    # beta_ref:  (1, E)    f32
    # o_ref:     (B, E)    f32
    pooled = jnp.sum(psum_ref[...], axis=0) * inv_hw              # (B, C)

    # Linear.  Bias omitted: it cancels exactly under the training-mode
    # batch-mean subtraction below.
    y = jnp.dot(pooled, w_ref[...], preferred_element_type=jnp.float32)

    # BatchNorm1d, training mode: full-batch stats, biased variance, eps=1e-5.
    mu = jnp.mean(y, axis=0, keepdims=True)                       # (1, E)
    d = y - mu
    var = jnp.mean(d * d, axis=0, keepdims=True)
    y_hat = d * lax.rsqrt(var + 1e-5) * gamma_ref[...] + beta_ref[...]

    # F.normalize(p=2, dim=1), eps=1e-12 clamp.
    nrm = jnp.sqrt(jnp.sum(y_hat * y_hat, axis=1, keepdims=True))
    o_ref[...] = y_hat / jnp.maximum(nrm, 1e-12)


def avg_pooling_forward(x, weight, bias, bn_gamma, bn_beta):
    """x: (B, C, H, W) NCHW.  weight: (E, C) as in nn.Linear.  -> (B, E) f32.

    `bias` is accepted for API parity with nn.Linear but is unused: under
    training-mode BatchNorm1d a per-feature bias cancels exactly in the
    batch-mean subtraction (and the module initializes it to 0 anyway).
    """
    del bias  # exact cancellation under training-mode BN (see docstring)

    B, C, H, W = x.shape
    E = weight.shape[0]
    HW = H * W
    itemsize = jnp.dtype(x.dtype).itemsize

    # Native layout: merge the spatial dims only (free reshape); no transpose
    # and no dtype-materializing astype pass over HBM.
    x_r = x.reshape(B, C, HW)

    # ---- tile sizing from *padded* footprints and actual VMEM capacity ----
    try:
        vmem_cap = pltpu.get_tpu_info().vmem_capacity_bytes
    except Exception:  # pragma: no cover - conservative fallback (v7x size)
        vmem_cap = 64 * 1024 * 1024
    C_pad = _round_up(C, 8)                  # sublane padding of the x block
    bytes_per_hw = B * C_pad * itemsize      # padded bytes per lane column
    # Target ~16 MiB per streamed block; double-buffered it must stay within
    # ~60% of this chip's VMEM (leaves headroom on v7x's 64 MiB).
    blk_target = min(16 * 1024 * 1024, (vmem_cap * 6 // 10) // 2)
    hw_blk = max(128, (blk_target // bytes_per_hw) // 128 * 128)
    hw_blk = min(hw_blk, _round_up(HW, 128))

    # Split the spatial chunks across a leading "parallel" axis (2 TCs on
    # v7x; degenerates to a serial loop on single-TC chips).
    n_chunks = pl.cdiv(_round_up(HW, 128), hw_blk)
    n_cores = 2 if n_chunks >= 2 else 1
    n_chunks = _round_up(n_chunks, n_cores)
    chunks_per_core = n_chunks // n_cores
    HW_pad = n_chunks * hw_blk
    if HW_pad != HW:
        # Zero padding leaves the accumulated sums unchanged.
        x_r = jnp.pad(x_r, ((0, 0), (0, 0), (0, HW_pad - HW)))

    # Padded VMEM footprints: x block pads C->C_pad sublanes (hw_blk already a
    # lane multiple); the (1, B, C) output block pads B->8, C->128.
    x_blk_bytes = B * C_pad * hw_blk * itemsize
    psum_blk_bytes = _round_up(B, 8) * _round_up(C, 128) * 4
    vmem_limit = int(max(16 * 1024 * 1024,
                         min(vmem_cap * 9 // 10,
                             2 * x_blk_bytes + 2 * psum_blk_bytes
                             + 2 * 1024 * 1024)))

    cost = pl.CostEstimate(
        flops=B * C * HW_pad,
        transcendentals=0,
        bytes_accessed=B * C * HW_pad * itemsize + n_cores * B * C * 4)

    psum = pl.pallas_call(
        _pool_partial_kernel,
        out_shape=jax.ShapeDtypeStruct((n_cores, B, C), jnp.float32),
        grid_spec=pltpu.PrefetchScalarGridSpec(
            num_scalar_prefetch=0,
            grid=(n_cores, chunks_per_core),
            in_specs=[
                pl.BlockSpec((B, C, hw_blk),
                             lambda p, k: (0, 0, p * chunks_per_core + k)),
            ],
            out_specs=pl.BlockSpec((1, B, C), lambda p, k: (p, 0, 0)),
        ),
        compiler_params=pltpu.CompilerParams(
            dimension_semantics=("parallel", "arbitrary"),
            vmem_limit_bytes=vmem_limit,
        ),
        cost_estimate=cost,
    )(x_r)

    # ---- tiny epilogue (single invocation, whole arrays in VMEM) ----
    w_t = jnp.transpose(weight).astype(jnp.float32)   # (C, E): lane-dense
    g2 = bn_gamma.reshape(1, E).astype(jnp.float32)
    be2 = bn_beta.reshape(1, E).astype(jnp.float32)

    return pl.pallas_call(
        functools.partial(_finalize_kernel, inv_hw=1.0 / float(HW)),
        out_shape=jax.ShapeDtypeStruct((B, E), jnp.float32),
    )(psum, w_t, g2, be2)


def _reference(x, weight, bias, bn_gamma, bn_beta):
    B, C, H, W = x.shape
    pooled = jnp.mean(x.reshape(B, C, H * W), axis=-1)
    y = pooled @ weight.T + bias
    mu = jnp.mean(y, axis=0, keepdims=True)
    var = jnp.mean((y - mu) ** 2, axis=0, keepdims=True)
    y_hat = (y - mu) / jnp.sqrt(var + 1e-5) * bn_gamma + bn_beta
    nrm = jnp.maximum(jnp.sqrt(jnp.sum(y_hat * y_hat, axis=1, keepdims=True)), 1e-12)
    return y_hat / nrm


if __name__ == "__main__":
    # Small shapes consistent with the module: NCHW conv features in,
    # embedding size E out.
    B, C, H, W = 2, 4, 16, 16
    E = 1024  # embeding_fea_size default

    key = jax.random.PRNGKey(0)
    kx, kw = jax.random.split(key)

    x = jax.random.normal(kx, (B, C, H, W), dtype=jnp.float32)

    # Deterministic parameter init matching __init__:
    #   kaiming_normal_(weight, mode='fan_out') -> std = sqrt(2 / out_features)
    #   bias = 0, bn weight = 1, bn bias = 0
    weight = jax.random.normal(kw, (E, C), dtype=jnp.float32) * math.sqrt(2.0 / E)
    bias = jnp.zeros((E,), dtype=jnp.float32)
    bn_gamma = jnp.ones((E,), dtype=jnp.float32)
    bn_beta = jnp.zeros((E,), dtype=jnp.float32)

    out = jax.block_until_ready(
        avg_pooling_forward(x, weight, bias, bn_gamma, bn_beta))

    assert out.shape == (B, E) and out.dtype == jnp.float32

    ref = jax.block_until_ready(_reference(x, weight, bias, bn_gamma, bn_beta))
    assert jnp.allclose(out, ref, rtol=1e-3, atol=1e-4), (
        float(jnp.max(jnp.abs(out - ref))))

    print("KERNEL_OK")
</pallas_src>

<mosaic_0001>
module attributes {stable_mosaic.version = 11 : i64} {
  func.func @_pool_partial_kernel(%arg0: i32, %arg1: i32, %arg2: memref<2x4x256xf32, #tpu.memory_space<vmem>>, %arg3: memref<1x2x4xf32, #tpu.memory_space<vmem>>) attributes {dimension_semantics = [#tpu.dimension_semantics<parallel>, #tpu.dimension_semantics<arbitrary>], iteration_bounds = array<i64: 1, 1>, scalar_prefetch = 0 : i64, scratch_operands = 0 : i64, tpu.core_type = #tpu.core_type<tc>, window_params = [{transform_indices = @transform_0, window_bounds = array<i64: 2, 4, 256>}, {transform_indices = @transform_1, window_bounds = array<i64: 1, 2, 4>}]} {
    %c0_i32 = arith.constant 0 : i32
    %0 = arith.cmpi eq, %arg1, %c0_i32 : i32
    %1 = arith.extui %0 : i1 to i32
    %c0_i32_0 = arith.constant 0 : i32
    %2 = arith.cmpi ne, %1, %c0_i32_0 : i32
    scf.if %2 {
      %cst_9 = arith.constant 0.000000e+00 : f32
      %9 = vector.broadcast %cst_9 : f32 to vector<1x2x4xf32>
      %c0_10 = arith.constant 0 : index
      %c0_11 = arith.constant 0 : index
      %c0_12 = arith.constant 0 : index
      %10 = vector.load %arg3[%c0_10, %c0_11, %c0_12] : memref<1x2x4xf32, #tpu.memory_space<vmem>>, vector<1x2x4xf32>
      tpu.vector_store %arg3[%c0_10, %c0_11, %c0_12], %9 {strides = array<i32>} : memref<1x2x4xf32, #tpu.memory_space<vmem>>, vector<1x2x4xf32>,
    } else {
    }
    %c0 = arith.constant 0 : index
    %c0_1 = arith.constant 0 : index
    %c0_2 = arith.constant 0 : index
    %3 = vector.load %arg2[%c0, %c0_1, %c0_2] : memref<2x4x256xf32, #tpu.memory_space<vmem>>, vector<2x4x256xf32>
    %c0_3 = arith.constant 0 : index
    %c0_4 = arith.constant 0 : index
    %c0_5 = arith.constant 0 : index
    %4 = vector.load %arg3[%c0_3, %c0_4, %c0_5] : memref<1x2x4xf32, #tpu.memory_space<vmem>>, vector<1x2x4xf32>
    %cst = arith.constant dense<0.000000e+00> : vector<2x4xf32>
    %5 = vector.multi_reduction <add>, %3, %cst [2] : vector<2x4x256xf32> to vector<2x4xf32>
    %6 = vector.shape_cast %5 : vector<2x4xf32> to vector<1x2x4xf32>
    %7 = arith.addf %4, %6 : vector<1x2x4xf32>
    %c0_6 = arith.constant 0 : index
    %c0_7 = arith.constant 0 : index
    %c0_8 = arith.constant 0 : index
    %8 = vector.load %arg3[%c0_6, %c0_7, %c0_8] : memref<1x2x4xf32, #tpu.memory_space<vmem>>, vector<1x2x4xf32>
    tpu.vector_store %arg3[%c0_6, %c0_7, %c0_8], %7 {strides = array<i32>} : memref<1x2x4xf32, #tpu.memory_space<vmem>>, vector<1x2x4xf32>,
    return
  }
  func.func @transform_0(%arg0: i32, %arg1: i32) -> (i32, i32, i32) {
    %c1_i32 = arith.constant 1 : i32
    %0 = arith.muli %arg0, %c1_i32 : i32
    %1 = arith.addi %0, %arg1 : i32
    %c0_i32 = arith.constant 0 : i32
    %c0_i32_0 = arith.constant 0 : i32
    %c0_i32_1 = arith.constant 0 : i32
    return %c0_i32, %c0_i32_0, %1 : i32, i32, i32
  }
  func.func @transform_1(%arg0: i32, %arg1: i32) -> (i32, i32, i32) {
    %c0_i32 = arith.constant 0 : i32
    %c0_i32_0 = arith.constant 0 : i32
    %c0_i32_1 = arith.constant 0 : i32
    return %arg0, %c0_i32, %c0_i32_0 : i32, i32, i32
  }
}

</mosaic_0001>

<llo_original>
// kernel: tpu_custom_call.1
$region0: #{tpu_custom_call.1}
  #allocation0 [shape = 'u32[]', space=smem, size = 0x4, offset = 0x4, fixed_abs, tag = 'smem constant byte address 0x4 - core index']
  #allocation1 [shape = 'u32[144,128]{1,0:T(1,128)}', space=vmem, size = 0x12000, scoped, tag = 'internal scratch']
  %s0 = inlined_call_operand.hbm [shape: f32[2,4,256], index: 0, kind: input, shape index: {}]
  %s1 = inlined_call_operand.hbm [shape: f32[1,2,4], index: 1, kind: output, shape index: {}]
  %s2 = sld [smem:[#allocation0]]
  $region22: #{tpu_custom_call.1} parent=0
    _
  %s4 = ssub.s32 1, %s2
  %s5 = scalar_select 0, %s4, %s2
  $region1: #{tpu_custom_call.1} parent=0
    #allocation2 [shape = 'u8[8192]{0}', space=vmem, size = 0x2000, scoped, tag = 'input window, operand 0, single buffered']
    #allocation3 [shape = 's32[1]{0}', space=sflag, size = 0x4, scoped, tag = 'scoped memory for tpu_custom_call.1']
    #allocation4 [shape = 's32[1]{0}', space=sflag, size = 0x4, scoped, tag = 'scoped memory for tpu_custom_call.1']
    #allocation5 [shape = 'u8[1024]{0}', space=vmem, size = 0x400, scoped, tag = 'output window, operand 0, single buffered']
    %6 = vsyncpa [#allocation3], 0
    %7 = vsyncpa [#allocation4], 0
    // Predicated region
    $region2: #{tpu_custom_call.1} parent=1 // pred_check
      _
    $region3: #{tpu_custom_call.1} parent=1 // pred_check_branch
      %9 = sbr.rel (0) target = $region5
    $region4: #{tpu_custom_call.1} parent=1 // pred_region
      %s10 = sadd.s32 0, 0
      %s11 = smul.u32 2, %s10
      %s13 = ssub.s32 256, 256
      %14 = vsyncadd [#allocation3], %s13
      %s15 = smul.addr %s11, 64
      %s16 = scalar_lea.hbm %s0, %s15
      %s17 = sshll.u32 [#allocation2], 4
      %s18 = int_to_ptr.vmem [resolvable:$true] %s17
      %23 = dma.hbm_to_vmem [thread:$0]  %s16, 256, %s18, [#allocation3], 128, 128, 8
    $region5: #{tpu_custom_call.1} parent=1 // pred_fallthru
      _
    // Predicated region
    $region6: #{tpu_custom_call.1} parent=1 // pred_check
      _
    $region7: #{tpu_custom_call.1} parent=1 // pred_check_branch
      %25 = sbr.rel (0) target = $region9
    $region8: #{tpu_custom_call.1} parent=1 // pred_region
      %26 = dma.done [#allocation3], 256
    $region9: #{tpu_custom_call.1} parent=1 // pred_fallthru
      _
    %s27 = sadd.s32 0, 0
    %s28 = smul.u32 2, %s27
    %p29 = scmp.eq.s32.totalorder 0, 0
    // Predicated region
    $region10: #{tpu_custom_call.1} parent=1 // pred_check
      %p30 = pneg %p29
    $region11: #{tpu_custom_call.1} parent=1 // pred_check_branch
      %32 = sbr.rel (%p30) target = $region13
    $region12: #{tpu_custom_call.1} parent=1 // pred_region
      %vm33 = vcmask 25600
      %34 = vst.msk [vmem:[#allocation5] sm:$0x3] %vm33, 0.0
    $region13: #{tpu_custom_call.1} parent=1 // pred_fallthru
      _
    %v35 = vld [vmem:[#allocation2] sm:$0xff]
    %v36 = vld [vmem:[#allocation2 + $0x8] sm:$0xff]
    %v37 = vld [vmem:[#allocation5] sm:$0x3]
    %v40 = vcombine.high %v35, %v35
    %v41 = vcombine.high %v36, %v36
    %vm44 = vcmask 1043456
    %v45 = vsel %vm44, %v35, 0.0
    %v46 = vsel %vm44, %v40, 0.0
    %v47 = vadd.f32 %v45, %v46
    %48 = vadd.xlane.f32.xlu0 %v47
    %v49 = vpop.xlane.xlu0 %48
    %v50 = vsel %vm44, %v36, 0.0
    %v51 = vsel %vm44, %v41, 0.0
    %v52 = vadd.f32 %v50, %v51
    %53 = vadd.xlane.f32.xlu0 %v52
    %v54 = vpop.xlane.xlu0 %53
    %v57 = vlaneseq
    %v58 = vand.u32 %v57, 127
    %v59 = vlaneseq
    %v60 = vshrl.u32 %v59, 7
    %v61 = vsub.s32 %v58, %v60
    %v62 = vrot.slane %v49, %v61
    %v63 = vlaneseq
    %v64 = vshrl.u32 %v63, 7
    %v65 = vsub.s32 %v58, %v64
    %v66 = vrot.slane %v54, %v65
    %vm67 = vcmask 1041409
    %v68 = vsel %vm67, %v66, %v62
    %v70 = vadd.f32 %v37, %v68
    %vm71 = vcmask 25600
    %72 = vst.msk [vmem:[#allocation5] sm:$0x3] %vm71, %v70
    // Predicated region
    $region14: #{tpu_custom_call.1} parent=1 // pred_check
      _
    $region15: #{tpu_custom_call.1} parent=1 // pred_check_branch
      %74 = sbr.rel (0) target = $region17
    $region16: #{tpu_custom_call.1} parent=1 // pred_region
      %s76 = ssub.s32 32, 32
      %77 = vsyncadd [#allocation4], %s76
      %s79 = sshll.u32 [#allocation5], 4
      %s80 = int_to_ptr.vmem [resolvable:$true] %s79
      %82 = dma.vmem_to_hbm [thread:$0]  %s80, 32, %s1, [#allocation4]
    $region17: #{tpu_custom_call.1} parent=1 // pred_fallthru
      _
    // Predicated region
    $region18: #{tpu_custom_call.1} parent=1 // pred_check
      _
    $region19: #{tpu_custom_call.1} parent=1 // pred_check_branch
      %84 = sbr.rel (0) target = $region21
    $region20: #{tpu_custom_call.1} parent=1 // pred_region
      %85 = dma.done [#allocation4], 32
    $region21: #{tpu_custom_call.1} parent=1 // pred_fallthru
      _
    %86 = vsyncpa [#allocation3], 1
    %87 = vsyncpa [#allocation4], 1

</llo_original>
